<compile_context>
chip_gen: v7x
topology: tpu7x:2x2x1
jax: 0.10.0
libtpu: 0.0.40
codegen_flags: <defaults>
</compile_context>

<pallas_src>
import jax
import jax.numpy as jnp
from jax.experimental import pallas as pl
from jax.experimental.pallas import tpu as pltpu


def _mish_kernel(x_ref, o_ref):
    x = x_ref[...].astype(jnp.float32)
    # mish(x) = x * tanh(softplus(x)) = x * e*(e+2) / (e*(e+2) + 2), e = exp(x)
    # Clamp before exp to avoid overflow; for x > 20, mish(x) == x in f32.
    xs = jnp.minimum(x, 20.0)
    e = jnp.exp(xs)
    n = e * (e + 2.0)
    y = x * n / (n + 2.0)
    y = jnp.where(x > 20.0, x, y)
    o_ref[...] = y.astype(o_ref.dtype)


def mish(x: jax.Array, *, target_block_bytes: int = 2 * 1024 * 1024) -> jax.Array:
    """Elementwise Mish for any shape/dtype, computed on lane-dense 2D tiles."""
    orig_shape = x.shape
    dtype = x.dtype
    total = x.size
    itemsize = jnp.dtype(dtype).itemsize
    # dtype-aware min sublane multiple: 8 (f32), 16 (bf16), 32 (int8/fp8)
    sub_mult = max(8, 32 // itemsize)

    # Pick a lane-dense column count that divides the flat size -> no padding,
    # no trailing slice, no extra HBM passes.
    cols = None
    for c in (512, 256, 128):
        if total % c == 0:
            cols = c
            break

    if cols is None:
        # TODO(synk): truly ragged sizes take a (rare) pad + slice fallback.
        cols = 128
        padded_total = pl.cdiv(total, cols) * cols
        flat = jnp.pad(x.reshape(-1), (0, padded_total - total))
    else:
        padded_total = total
        flat = x.reshape(-1)

    rows = padded_total // cols
    x2d = flat.reshape(rows, cols)

    if rows <= 2 * sub_mult:
        # Small tensor: a single block equal to the full array (always legal,
        # even below the min tile, because block_shape == array shape).
        br = rows
    else:
        # ~2 MiB per block buffer; double-buffered in+out stays under the
        # v5e 16 MiB scoped-VMEM default with headroom.
        br = max(sub_mult, target_block_bytes // (cols * itemsize))
        # Keep at least 2 grid steps so the "parallel" axis can shard across
        # both TensorCores on v7x.
        br = min(br, (rows + 1) // 2)
        br = max(sub_mult, (br // sub_mult) * sub_mult)

    grid = (pl.cdiv(rows, br),)

    out2d = pl.pallas_call(
        _mish_kernel,
        out_shape=jax.ShapeDtypeStruct((rows, cols), dtype),
        grid=grid,
        in_specs=[pl.BlockSpec((br, cols), lambda i: (i, 0))],
        out_specs=pl.BlockSpec((br, cols), lambda i: (i, 0)),
        compiler_params=pltpu.CompilerParams(
            dimension_semantics=("parallel",),
        ),
        cost_estimate=pl.CostEstimate(
            flops=7 * padded_total,
            transcendentals=padded_total,
            bytes_accessed=2 * padded_total * itemsize,
        ),
    )(x2d)

    out = out2d.reshape(-1)
    if padded_total != total:
        out = out[:total]
    return out.reshape(orig_shape)


def _mish_ref(x):
    # pure-JAX reference for verification
    return x * jnp.tanh(jax.nn.softplus(x))


if __name__ == "__main__":
    key = jax.random.PRNGKey(0)
    x = jax.random.normal(key, (2, 4, 16, 16), dtype=jnp.float32)

    y = mish(x)
    jax.block_until_ready(y)

    y_ref = _mish_ref(x)
    assert y.shape == x.shape and y.dtype == x.dtype
    assert jnp.allclose(y, y_ref, atol=1e-5, rtol=1e-5)

    print("KERNEL_OK")
</pallas_src>

<mosaic_0001>
module attributes {stable_mosaic.version = 11 : i64} {
  func.func @_mish_kernel(%arg0: i32, %arg1: memref<4x512xf32, #tpu.memory_space<vmem>>, %arg2: memref<4x512xf32, #tpu.memory_space<vmem>>) attributes {dimension_semantics = [#tpu.dimension_semantics<parallel>], iteration_bounds = array<i64: 1>, scalar_prefetch = 0 : i64, scratch_operands = 0 : i64, tpu.core_type = #tpu.core_type<tc>, window_params = [{transform_indices = @transform_0, window_bounds = array<i64: 4, 512>}, {transform_indices = @transform_1, window_bounds = array<i64: 4, 512>}]} {
    %c0 = arith.constant 0 : index
    %c0_0 = arith.constant 0 : index
    %0 = vector.load %arg1[%c0, %c0_0] : memref<4x512xf32, #tpu.memory_space<vmem>>, vector<4x512xf32>
    %cst = arith.constant 2.000000e+01 : f32
    %1 = vector.broadcast %cst : f32 to vector<4x512xf32>
    %2 = arith.minimumf %0, %1 : vector<4x512xf32>
    %3 = math.exp %2 : vector<4x512xf32>
    %cst_1 = arith.constant 2.000000e+00 : f32
    %4 = vector.broadcast %cst_1 : f32 to vector<4x512xf32>
    %5 = arith.addf %3, %4 : vector<4x512xf32>
    %6 = arith.mulf %3, %5 : vector<4x512xf32>
    %7 = arith.mulf %0, %6 : vector<4x512xf32>
    %cst_2 = arith.constant 2.000000e+00 : f32
    %8 = vector.broadcast %cst_2 : f32 to vector<4x512xf32>
    %9 = arith.addf %6, %8 : vector<4x512xf32>
    %10 = arith.divf %7, %9 : vector<4x512xf32>
    %cst_3 = arith.constant 2.000000e+01 : f32
    %11 = vector.broadcast %cst_3 : f32 to vector<4x512xf32>
    %12 = arith.cmpf ogt, %0, %11 : vector<4x512xf32>
    %13 = arith.select %12, %0, %10 : vector<4x512xi1>, vector<4x512xf32>
    %c0_4 = arith.constant 0 : index
    %c0_5 = arith.constant 0 : index
    %14 = vector.load %arg2[%c0_4, %c0_5] : memref<4x512xf32, #tpu.memory_space<vmem>>, vector<4x512xf32>
    tpu.vector_store %arg2[%c0_4, %c0_5], %13 {strides = array<i32>} : memref<4x512xf32, #tpu.memory_space<vmem>>, vector<4x512xf32>,
    return
  }
  func.func @transform_0(%arg0: i32) -> (i32, i32) {
    %c0_i32 = arith.constant 0 : i32
    %c0_i32_0 = arith.constant 0 : i32
    return %arg0, %c0_i32 : i32, i32
  }
  func.func @transform_1(%arg0: i32) -> (i32, i32) {
    %c0_i32 = arith.constant 0 : i32
    %c0_i32_0 = arith.constant 0 : i32
    return %arg0, %c0_i32 : i32, i32
  }
}

</mosaic_0001>

<llo_original>
// kernel: tpu_custom_call.1
$region0: #{tpu_custom_call.1}
  #allocation0 [shape = 'u32[]', space=smem, size = 0x4, offset = 0x4, fixed_abs, tag = 'smem constant byte address 0x4 - core index']
  #allocation1 [shape = 'u32[144,128]{1,0:T(1,128)}', space=vmem, size = 0x12000, scoped, tag = 'internal scratch']
  %s0 = inlined_call_operand.hbm [shape: f32[4,512], index: 0, kind: input, shape index: {}]
  %s1 = inlined_call_operand.hbm [shape: f32[4,512], index: 1, kind: output, shape index: {}]
  %s2 = sld [smem:[#allocation0]]
  $region18: #{tpu_custom_call.1} parent=0
    _
  %s4 = ssub.s32 1, %s2
  %s5 = scalar_select 0, %s4, %s2
  $region1: #{tpu_custom_call.1} parent=0
    #allocation2 [shape = 'u8[8192]{0}', space=vmem, size = 0x2000, scoped, tag = 'input window, operand 0, single buffered']
    #allocation3 [shape = 's32[1]{0}', space=sflag, size = 0x4, scoped, tag = 'scoped memory for tpu_custom_call.1']
    #allocation4 [shape = 's32[1]{0}', space=sflag, size = 0x4, scoped, tag = 'scoped memory for tpu_custom_call.1']
    #allocation5 [shape = 'u8[8192]{0}', space=vmem, size = 0x2000, scoped, tag = 'output window, operand 0, single buffered']
    %6 = vsyncpa [#allocation3], 0
    %7 = vsyncpa [#allocation4], 0
    // Predicated region
    $region2: #{tpu_custom_call.1} parent=1 // pred_check
      _
    $region3: #{tpu_custom_call.1} parent=1 // pred_check_branch
      %9 = sbr.rel (0) target = $region5
    $region4: #{tpu_custom_call.1} parent=1 // pred_region
      %s11 = ssub.s32 256, 256
      %12 = vsyncadd [#allocation3], %s11
      %s14 = sshll.u32 [#allocation2], 4
      %s15 = int_to_ptr.vmem [resolvable:$true] %s14
      %17 = dma.hbm_to_vmem [thread:$0]  %s0, 256, %s15, [#allocation3]
    $region5: #{tpu_custom_call.1} parent=1 // pred_fallthru
      _
    // Predicated region
    $region6: #{tpu_custom_call.1} parent=1 // pred_check
      _
    $region7: #{tpu_custom_call.1} parent=1 // pred_check_branch
      %19 = sbr.rel (0) target = $region9
    $region8: #{tpu_custom_call.1} parent=1 // pred_region
      %20 = dma.done [#allocation3], 256
    $region9: #{tpu_custom_call.1} parent=1 // pred_fallthru
      _
    %v21 = vld [vmem:[#allocation2] sm:$0xff]
    %v22 = vld [vmem:[#allocation2 + $0x8] sm:$0xff]
    %v23 = vmin.f32 %v21, 20.0
    %v24 = vmin.f32 %v22, 20.0
    %v25 = vmul.f32 %v23, 1.442695
    %v26 = vpow.pop %v25
    %v27 = vmul.f32 %v24, 1.442695
    %v28 = vpow.pop %v27
    %v29 = vadd.f32 %v26, 2.0
    %v30 = vadd.f32 %v28, 2.0
    %v31 = vmul.f32 %v26, %v29
    %v32 = vmul.f32 %v28, %v30
    %v33 = vmul.f32 %v21, %v31
    %v34 = vmul.f32 %v22, %v32
    %v35 = vadd.f32 %v31, 2.0
    %v36 = vadd.f32 %v32, 2.0
    %v37 = vrcp.pop %v35
    %v38 = vmul.f32 %v33, %v37
    %v39 = vrcp.pop %v36
    %v40 = vmul.f32 %v34, %v39
    %vm41 = vcmp.gt.f32.partialorder %v21, 20.0
    %vm42 = vcmp.gt.f32.partialorder %v22, 20.0
    %v43 = vsel %vm41, %v21, %v38
    %v44 = vsel %vm42, %v22, %v40
    %45 = vst [vmem:[#allocation5] sm:$0xff] %v43
    %46 = vst [vmem:[#allocation5 + $0x8] sm:$0xff] %v44
    // Predicated region
    $region10: #{tpu_custom_call.1} parent=1 // pred_check
      _
    $region11: #{tpu_custom_call.1} parent=1 // pred_check_branch
      %48 = sbr.rel (0) target = $region13
    $region12: #{tpu_custom_call.1} parent=1 // pred_region
      %s50 = ssub.s32 256, 256
      %51 = vsyncadd [#allocation4], %s50
      %s53 = sshll.u32 [#allocation5], 4
      %s54 = int_to_ptr.vmem [resolvable:$true] %s53
      %56 = dma.vmem_to_hbm [thread:$0]  %s54, 256, %s1, [#allocation4]
    $region13: #{tpu_custom_call.1} parent=1 // pred_fallthru
      _
    // Predicated region
    $region14: #{tpu_custom_call.1} parent=1 // pred_check
      _
    $region15: #{tpu_custom_call.1} parent=1 // pred_check_branch
      %58 = sbr.rel (0) target = $region17
    $region16: #{tpu_custom_call.1} parent=1 // pred_region
      %59 = dma.done [#allocation4], 256
    $region17: #{tpu_custom_call.1} parent=1 // pred_fallthru
      _
    %60 = vsyncpa [#allocation3], 1
    %61 = vsyncpa [#allocation4], 1

</llo_original>
